<compile_context>
chip_gen: v7x
topology: tpu7x:2x2x1
jax: 0.10.0
libtpu: 0.0.40
codegen_flags: <defaults>
</compile_context>

<pallas_src>
import math

import jax
import jax.numpy as jnp
from jax.experimental import pallas as pl
from jax.experimental.pallas import tpu as pltpu


def _normalize_kernel(x_ref, mean_ref, inv_std_ref, o_ref):
    # x_ref: (tile_r, lane_chunk); mean_ref / inv_std_ref: (tile_r, 1)
    o_ref[...] = ((x_ref[...] - mean_ref[...]) * inv_std_ref[...]).astype(o_ref.dtype)


def _round_up(v, m):
    return ((v + m - 1) // m) * m


def normalize(x, mean, std):
    """Pallas equivalent of Normalize(mean, std, mode).forward(x).

    x    : (B, C, *spatial)  — NCHW ('conv2d'-style) or NCDHW ('conv3d').
    mean : scalar or length-C sequence (broadcast over batch & spatial dims).
    std  : scalar or length-C sequence.
    """
    # TODO(synk): integer inputs (e.g. uint8 images) are not supported here — the
    # PyTorch module would error on in-place float sub_ anyway; float dtypes only.
    orig_shape = x.shape
    b, c = int(orig_shape[0]), int(orig_shape[1])
    spatial = int(math.prod(orig_shape[2:]))
    rows = b * c
    itemsize = int(jnp.dtype(x.dtype).itemsize)

    # Lane-dense 2D view: one row per (batch, channel) pair.
    x2 = x.reshape(rows, spatial)

    # Per-channel -> per-row parameter columns (tiny; host-side cost negligible).
    mean_c = jnp.broadcast_to(jnp.asarray(mean, jnp.float32).reshape(-1), (c,))
    std_c = jnp.broadcast_to(jnp.asarray(std, jnp.float32).reshape(-1), (c,))
    inv_std_c = 1.0 / std_c
    mean_rows = jnp.tile(mean_c, b).reshape(rows, 1)       # row r -> channel r % c
    inv_std_rows = jnp.tile(inv_std_c, b).reshape(rows, 1)

    # --- Tiling ---------------------------------------------------------------
    # Dtype-aware sublane multiple: 8 (f32) / 16 (bf16) / 32 (int8/fp8).
    sub_mult = max(8, 32 // itemsize)

    # Lane chunk: multiple of 128 (2048 lanes) for large spatial, full extent
    # otherwise (full extent is always a legal block dim).
    LANE_CHUNK_TARGET = 2048
    lane_chunk = LANE_CHUNK_TARGET if spatial > LANE_CHUNK_TARGET else spatial

    # Row tile sized against ~6 MiB per block (2x in + 2x out double-buffered
    # ~ 24 MiB live, under the 48 MiB scoped limit below on every generation).
    MAX_BLOCK_BYTES = 6 * 1024 * 1024
    stripe_bytes = max(1, lane_chunk * itemsize)
    tile_r = max(1, MAX_BLOCK_BYTES // stripe_bytes)
    if tile_r >= rows:
        tile_r = rows                                       # full extent, always legal
    else:
        tile_r = max(sub_mult, (tile_r // sub_mult) * sub_mult)

    n_r = pl.cdiv(rows, tile_r)
    n_l = pl.cdiv(spatial, lane_chunk)
    # Guarantee >= 2 grid steps on a parallel axis when the shape allows it
    # (megacore sharding on v7x + actual pipeline overlap).
    if n_r * n_l < 2 and rows > sub_mult:
        tile_r = _round_up(-(-rows // 2), sub_mult)
        n_r = pl.cdiv(rows, tile_r)
    grid = (n_r, n_l)

    n_elems = rows * spatial
    cost = pl.CostEstimate(
        flops=2 * n_elems,
        transcendentals=0,
        bytes_accessed=2 * n_elems * itemsize + 2 * rows * 4,
    )

    out2 = pl.pallas_call(
        _normalize_kernel,
        out_shape=jax.ShapeDtypeStruct((rows, spatial), x.dtype),
        grid_spec=pltpu.PrefetchScalarGridSpec(
            num_scalar_prefetch=0,
            grid=grid,
            in_specs=[
                pl.BlockSpec((tile_r, lane_chunk), lambda i, j: (i, j)),
                pl.BlockSpec((tile_r, 1), lambda i, j: (i, 0)),
                pl.BlockSpec((tile_r, 1), lambda i, j: (i, 0)),
            ],
            out_specs=pl.BlockSpec((tile_r, lane_chunk), lambda i, j: (i, j)),
        ),
        compiler_params=pltpu.CompilerParams(
            dimension_semantics=("parallel", "parallel"),
            vmem_limit_bytes=48 * 1024 * 1024,
        ),
        input_output_aliases={0: 0},
        cost_estimate=cost,
    )(x2, mean_rows, inv_std_rows)

    return out2.reshape(orig_shape)


if __name__ == "__main__":
    key = jax.random.PRNGKey(0)
    k0, k1 = jax.random.split(key, 2)

    # ---- 2D conv mode: scalar mean/std (matches the module's non-conv3d path) ----
    B, C, H, W = 2, 4, 16, 16
    x = jax.random.normal(k0, (B, C, H, W), dtype=jnp.float32)
    mean2d, std2d = 0.5, 0.25
    mean_b = jnp.asarray([mean2d], jnp.float32)[None, :, None, None]
    std_b = jnp.asarray([std2d], jnp.float32)[None, :, None, None]
    ref = (x - mean_b) / std_b                      # reference before kernel (aliasing-safe)

    out = normalize(x, mean2d, std2d)
    out = jax.block_until_ready(out)
    assert out.shape == ref.shape and out.dtype == ref.dtype
    assert bool(jnp.allclose(out, ref, rtol=1e-6, atol=1e-6))

    # ---- conv3d mode: per-channel list mean/std on a 5D NCDHW tensor ----
    B3, C3, D3, H3, W3 = 2, 3, 4, 8, 8
    x3 = jax.random.normal(k1, (B3, C3, D3, H3, W3), dtype=jnp.float32)
    mean3d = [0.485, 0.456, 0.406]
    std3d = [0.229, 0.224, 0.225]
    mean3_b = jnp.asarray(mean3d, jnp.float32)[None, :, None, None, None]
    std3_b = jnp.asarray(std3d, jnp.float32)[None, :, None, None, None]
    ref3 = (x3 - mean3_b) / std3_b

    out3 = normalize(x3, mean3d, std3d)
    out3 = jax.block_until_ready(out3)
    assert out3.shape == ref3.shape and out3.dtype == ref3.dtype
    assert bool(jnp.allclose(out3, ref3, rtol=1e-6, atol=1e-6))

    # TODO(synk): PyTorch `inplace=True` mutation has no JAX equivalent; the
    # functional result is returned (input_output_aliases lets XLA reuse the buffer).
    print("KERNEL_OK")
</pallas_src>

<mosaic_0001>
module attributes {stable_mosaic.version = 11 : i64} {
  func.func @_normalize_kernel(%arg0: i32, %arg1: i32, %arg2: memref<8x256xf32, #tpu.memory_space<vmem>>, %arg3: memref<8x1xf32, #tpu.memory_space<vmem>>, %arg4: memref<8x1xf32, #tpu.memory_space<vmem>>, %arg5: memref<8x256xf32, #tpu.memory_space<vmem>>) attributes {dimension_semantics = [#tpu.dimension_semantics<parallel>, #tpu.dimension_semantics<parallel>], iteration_bounds = array<i64: 1, 1>, scalar_prefetch = 0 : i64, scratch_operands = 0 : i64, tpu.core_type = #tpu.core_type<tc>, window_params = [{transform_indices = @transform_0, window_bounds = array<i64: 8, 256>}, {transform_indices = @transform_1, window_bounds = array<i64: 8, 1>}, {transform_indices = @transform_2, window_bounds = array<i64: 8, 1>}, {transform_indices = @transform_3, window_bounds = array<i64: 8, 256>}]} {
    %c0 = arith.constant 0 : index
    %c0_0 = arith.constant 0 : index
    %0 = vector.load %arg2[%c0, %c0_0] : memref<8x256xf32, #tpu.memory_space<vmem>>, vector<8x256xf32>
    %c0_1 = arith.constant 0 : index
    %c0_2 = arith.constant 0 : index
    %1 = vector.load %arg3[%c0_1, %c0_2] : memref<8x1xf32, #tpu.memory_space<vmem>>, vector<8x1xf32>
    %2 = vector.broadcast %1 : vector<8x1xf32> to vector<8x256xf32>
    %3 = arith.subf %0, %2 : vector<8x256xf32>
    %c0_3 = arith.constant 0 : index
    %c0_4 = arith.constant 0 : index
    %4 = vector.load %arg4[%c0_3, %c0_4] : memref<8x1xf32, #tpu.memory_space<vmem>>, vector<8x1xf32>
    %5 = vector.broadcast %4 : vector<8x1xf32> to vector<8x256xf32>
    %6 = arith.mulf %3, %5 : vector<8x256xf32>
    %c0_5 = arith.constant 0 : index
    %c0_6 = arith.constant 0 : index
    %7 = vector.load %arg5[%c0_5, %c0_6] : memref<8x256xf32, #tpu.memory_space<vmem>>, vector<8x256xf32>
    tpu.vector_store %arg5[%c0_5, %c0_6], %6 {strides = array<i32>} : memref<8x256xf32, #tpu.memory_space<vmem>>, vector<8x256xf32>,
    return
  }
  func.func @transform_0(%arg0: i32, %arg1: i32) -> (i32, i32) {
    %c0_i32 = arith.constant 0 : i32
    return %arg0, %arg1 : i32, i32
  }
  func.func @transform_1(%arg0: i32, %arg1: i32) -> (i32, i32) {
    %c0_i32 = arith.constant 0 : i32
    %c0_i32_0 = arith.constant 0 : i32
    return %arg0, %c0_i32 : i32, i32
  }
  func.func @transform_2(%arg0: i32, %arg1: i32) -> (i32, i32) {
    %c0_i32 = arith.constant 0 : i32
    %c0_i32_0 = arith.constant 0 : i32
    return %arg0, %c0_i32 : i32, i32
  }
  func.func @transform_3(%arg0: i32, %arg1: i32) -> (i32, i32) {
    %c0_i32 = arith.constant 0 : i32
    return %arg0, %arg1 : i32, i32
  }
}

</mosaic_0001>

<llo_original>
// kernel: tpu_custom_call.1
$region0: #{tpu_custom_call.1}
  #allocation0 [shape = 'u32[]', space=smem, size = 0x4, offset = 0x4, fixed_abs, tag = 'smem constant byte address 0x4 - core index']
  #allocation1 [shape = 'u32[144,128]{1,0:T(1,128)}', space=vmem, size = 0x12000, scoped, tag = 'internal scratch']
  %s0 = inlined_call_operand.hbm [shape: f32[8,256], index: 0, kind: input, shape index: {}, may-alias: {0,3}]
  %s1 = inlined_call_operand.vmem [shape: f32[8,1], index: 1, kind: input, shape index: {}]
  %s2 = inlined_call_operand.vmem [shape: f32[8,1], index: 2, kind: input, shape index: {}]
  %s3 = inlined_call_operand.hbm [shape: f32[8,256], index: 3, kind: output, shape index: {}, may-alias: {0,3}]
  %s4 = sld [smem:[#allocation0]]
  $region26: #{tpu_custom_call.1} parent=0
    _
  %s6 = ssub.s32 1, %s4
  %s7 = scalar_select 0, %s6, %s4
  $region1: #{tpu_custom_call.1} parent=0
    #allocation2 [shape = 'u8[8192]{0}', space=vmem, size = 0x2000, scoped, tag = 'input window, operand 0, single buffered']
    #allocation3 [shape = 's32[1]{0}', space=sflag, size = 0x4, scoped, tag = 'scoped memory for tpu_custom_call.1']
    #allocation4 [shape = 's32[1]{0}', space=sflag, size = 0x4, scoped, tag = 'scoped memory for tpu_custom_call.1']
    #allocation5 [shape = 'u8[8192]{0}', space=vmem, size = 0x2000, scoped, tag = 'output window, operand 0, single buffered']
    %8 = vsyncpa [#allocation3], 0
    %9 = vsyncpa [#allocation4], 0
    // Predicated region
    $region2: #{tpu_custom_call.1} parent=1 // pred_check
      _
    $region3: #{tpu_custom_call.1} parent=1 // pred_check_branch
      %11 = sbr.rel (0) target = $region5
    $region4: #{tpu_custom_call.1} parent=1 // pred_region
      %s13 = ssub.s32 256, 256
      %14 = vsyncadd [#allocation3], %s13
      %s16 = sshll.u32 [#allocation2], 4
      %s17 = int_to_ptr.vmem [resolvable:$true] %s16
      %19 = dma.hbm_to_vmem [thread:$0]  %s0, 256, %s17, [#allocation3]
    $region5: #{tpu_custom_call.1} parent=1 // pred_fallthru
      _
    // Predicated region
    $region6: #{tpu_custom_call.1} parent=1 // pred_check
      _
    $region7: #{tpu_custom_call.1} parent=1 // pred_check_branch
      %21 = sbr.rel (0) target = $region9
    $region8: #{tpu_custom_call.1} parent=1 // pred_region
      _
    $region9: #{tpu_custom_call.1} parent=1 // pred_fallthru
      _
    // Predicated region
    $region10: #{tpu_custom_call.1} parent=1 // pred_check
      _
    $region11: #{tpu_custom_call.1} parent=1 // pred_check_branch
      %23 = sbr.rel (0) target = $region13
    $region12: #{tpu_custom_call.1} parent=1 // pred_region
      _
    $region13: #{tpu_custom_call.1} parent=1 // pred_fallthru
      _
    // Predicated region
    $region14: #{tpu_custom_call.1} parent=1 // pred_check
      _
    $region15: #{tpu_custom_call.1} parent=1 // pred_check_branch
      %25 = sbr.rel (0) target = $region17
    $region16: #{tpu_custom_call.1} parent=1 // pred_region
      %26 = dma.done [#allocation3], 256
    $region17: #{tpu_custom_call.1} parent=1 // pred_fallthru
      _
    %v27 = vld [vmem:[#allocation2] sm:$0xff]
    %v28 = vld [vmem:[#allocation2 + $0x8] sm:$0xff]
    %v29 = vld [vmem:[%s1] sm:$0xff]
    %31 = vset.pattern.permute.xlu0 0
    %32 = vperm.xlu0 %31, %v29
    %v33 = vpop.permute.xlu0 %32
    %v35 = vsub.f32 %v27, %v33
    %v36 = vsub.f32 %v28, %v33
    %v37 = vld [vmem:[%s2] sm:$0xff]
    %39 = vset.pattern.permute.xlu0 0
    %40 = vperm.xlu0 %39, %v37
    %v41 = vpop.permute.xlu0 %40
    %v43 = vmul.f32 %v35, %v41
    %v44 = vmul.f32 %v36, %v41
    %45 = vst [vmem:[#allocation5] sm:$0xff] %v43
    %46 = vst [vmem:[#allocation5 + $0x8] sm:$0xff] %v44
    // Predicated region
    $region18: #{tpu_custom_call.1} parent=1 // pred_check
      _
    $region19: #{tpu_custom_call.1} parent=1 // pred_check_branch
      %48 = sbr.rel (0) target = $region21
    $region20: #{tpu_custom_call.1} parent=1 // pred_region
      %s50 = ssub.s32 256, 256
      %51 = vsyncadd [#allocation4], %s50
      %s53 = sshll.u32 [#allocation5], 4
      %s54 = int_to_ptr.vmem [resolvable:$true] %s53
      %56 = dma.vmem_to_hbm [thread:$0]  %s54, 256, %s3, [#allocation4]
    $region21: #{tpu_custom_call.1} parent=1 // pred_fallthru
      _
    // Predicated region
    $region22: #{tpu_custom_call.1} parent=1 // pred_check
      _
    $region23: #{tpu_custom_call.1} parent=1 // pred_check_branch
      %58 = sbr.rel (0) target = $region25
    $region24: #{tpu_custom_call.1} parent=1 // pred_region
      %59 = dma.done [#allocation4], 256
    $region25: #{tpu_custom_call.1} parent=1 // pred_fallthru
      _
    %60 = vsyncpa [#allocation3], 1
    %61 = vsyncpa [#allocation4], 1

</llo_original>
